<compile_context>
chip_gen: v7x
topology: tpu7x:2x2x1
jax: 0.10.0
libtpu: 0.0.40
codegen_flags: <defaults>
</compile_context>

<pallas_src>
import functools

import jax
import jax.numpy as jnp
from jax.experimental import pallas as pl
from jax.experimental.pallas import tpu as pltpu

_LANES = 128
_SUBLANES = 8
_MAX_BLOCK_ROWS = 2048   # 2048 * 128 * 4 B = 1 MiB per f32 block
_MIN_BLOCK_ROWS = 512
_LN2 = 0.6931471805599453


def _round_up(x, m):
    return ((x + m - 1) // m) * m


def _choose_tiling(n):
    """Return (rows_padded, block_rows); rows_padded % block_rows == 0."""
    rows = _round_up(pl.cdiv(n, _LANES), _SUBLANES)
    if rows <= _MAX_BLOCK_ROWS:
        return rows, rows
    # Prefer a divisor of rows (no extra padding) that is a multiple of 8.
    for br in range(_MAX_BLOCK_ROWS, _MIN_BLOCK_ROWS - 1, -_SUBLANES):
        if rows % br == 0:
            return rows, br
    # Pathological size: pad rows up to a multiple of the max block instead of
    # degrading to tiny blocks.
    return _round_up(rows, _MAX_BLOCK_ROWS), _MAX_BLOCK_ROWS


def _softplus_loss(x, real):
    # BCE-with-logits with constant label:
    #   y=1 -> softplus(-x),  y=0 -> softplus(x)
    z = -x if real else x
    return jnp.maximum(z, 0.0) + jnp.log1p(jnp.exp(-jnp.abs(z)))


# ---------------------------------------------------------------------------
# Kernels
# ---------------------------------------------------------------------------
def _bce_partial_kernel(x_ref, o_ref, *, real):
    """Per-block partial sums: (block_rows,128) -> (8,128) via VPU vreg adds."""
    x = x_ref[...].astype(jnp.float32)
    loss = _softplus_loss(x, real)
    rows = loss.shape[0]
    o_ref[...] = loss.reshape(rows // _SUBLANES, _SUBLANES, _LANES).sum(axis=0)


def _bce_elem_kernel(x_ref, o_ref, *, real):
    x = x_ref[...].astype(jnp.float32)
    o_ref[...] = _softplus_loss(x, real).astype(o_ref.dtype)


# ---------------------------------------------------------------------------
# Wrapper
# ---------------------------------------------------------------------------
def vanilla_gan_loss(prediction, real=True, reduction="mean"):
    """Equivalent of VanillaGenerativeAdversarialLoss(reduction)(prediction, real)."""
    if reduction not in ("mean", "sum", "none"):
        raise ValueError(f"unknown reduction: {reduction}")

    orig_shape = prediction.shape
    orig_dtype = prediction.dtype
    n = int(prediction.size)

    rows_padded, block_rows = _choose_tiling(n)
    n_padded = rows_padded * _LANES

    flat = prediction.reshape(-1)
    if n_padded != n:
        flat = jnp.pad(flat, (0, n_padded - n))
    x2d = flat.reshape(rows_padded, _LANES)
    grid = (rows_padded // block_rows,)

    if reduction == "none":
        kernel = functools.partial(_bce_elem_kernel, real=real)
        out = pl.pallas_call(
            kernel,
            out_shape=jax.ShapeDtypeStruct((rows_padded, _LANES), orig_dtype),
            grid_spec=pltpu.PrefetchScalarGridSpec(
                num_scalar_prefetch=0,
                grid=grid,
                in_specs=[pl.BlockSpec((block_rows, _LANES), lambda i: (i, 0))],
                out_specs=pl.BlockSpec((block_rows, _LANES), lambda i: (i, 0)),
            ),
            compiler_params=pltpu.CompilerParams(
                dimension_semantics=("parallel",)
            ),
        )(x2d)
        if n_padded != n:
            return out.reshape(-1)[:n].reshape(orig_shape)
        return out.reshape(orig_shape)

    # 'mean' or 'sum': per-block (8,128) partials, reduced in the wrapper.
    kernel = functools.partial(_bce_partial_kernel, real=real)
    partials = pl.pallas_call(
        kernel,
        out_shape=jax.ShapeDtypeStruct((grid[0] * _SUBLANES, _LANES), jnp.float32),
        grid_spec=pltpu.PrefetchScalarGridSpec(
            num_scalar_prefetch=0,
            grid=grid,
            in_specs=[pl.BlockSpec((block_rows, _LANES), lambda i: (i, 0))],
            out_specs=pl.BlockSpec((_SUBLANES, _LANES), lambda i: (i, 0)),
        ),
        compiler_params=pltpu.CompilerParams(
            dimension_semantics=("parallel",)
        ),
    )(x2d)

    total = jnp.sum(partials)
    if n_padded != n:
        # Each padded zero contributes softplus(0) = ln 2 regardless of label.
        total = total - jnp.float32(n_padded - n) * jnp.float32(_LN2)
    if reduction == "sum":
        return total
    return total / jnp.float32(n)


# ---------------------------------------------------------------------------
# Pure-JAX reference (for a quick self-check)
# ---------------------------------------------------------------------------
def _ref_loss(prediction, real=True, reduction="mean"):
    x = prediction.astype(jnp.float32)
    y = jnp.float32(1.0 if real else 0.0)
    loss = jnp.maximum(x, 0.0) - x * y + jnp.log1p(jnp.exp(-jnp.abs(x)))
    if reduction == "mean":
        return jnp.mean(loss)
    if reduction == "sum":
        return jnp.sum(loss)
    return loss.astype(prediction.dtype)


if __name__ == "__main__":
    key = jax.random.PRNGKey(0)
    k1, k2 = jax.random.split(key)
    # Unnormalized discriminator predictions (logits), NCHW-like shapes.
    test_inputs = [
        jax.random.normal(k1, (2, 4, 16, 16), dtype=jnp.float32) * 3.0,  # aligned
        jax.random.normal(k2, (2, 1, 30, 30), dtype=jnp.float32) * 3.0,  # pad path
    ]

    ok = True
    for x in test_inputs:
        for real in (True, False):
            for reduction in ("mean", "sum", "none"):
                got = jax.block_until_ready(
                    vanilla_gan_loss(x, real=real, reduction=reduction)
                )
                want = _ref_loss(x, real=real, reduction=reduction)
                if got.shape != want.shape or not jnp.allclose(
                    got.astype(jnp.float32),
                    want.astype(jnp.float32),
                    rtol=1e-5,
                    atol=1e-5,
                ):
                    ok = False

    if ok:
        print("KERNEL_OK")
    else:
        print("KERNEL_MISMATCH")
</pallas_src>

<mosaic_0001>
module attributes {stable_mosaic.version = 11 : i64} {
  func.func @_bce_partial_kernel(%arg0: i32, %arg1: memref<16x128xf32, #tpu.memory_space<vmem>>, %arg2: memref<8x128xf32, #tpu.memory_space<vmem>>) attributes {dimension_semantics = [#tpu.dimension_semantics<parallel>], iteration_bounds = array<i64: 1>, scalar_prefetch = 0 : i64, scratch_operands = 0 : i64, tpu.core_type = #tpu.core_type<tc>, window_params = [{transform_indices = @transform_0, window_bounds = array<i64: 16, 128>}, {transform_indices = @transform_1, window_bounds = array<i64: 8, 128>}]} {
    %c0 = arith.constant 0 : index
    %c0_0 = arith.constant 0 : index
    %0 = vector.load %arg1[%c0, %c0_0] : memref<16x128xf32, #tpu.memory_space<vmem>>, vector<16x128xf32>
    %cst = arith.constant 0.000000e+00 : f32
    %1 = vector.broadcast %cst : f32 to vector<16x128xf32>
    %2 = arith.subf %1, %0 : vector<16x128xf32>
    %cst_1 = arith.constant 0.000000e+00 : f32
    %3 = vector.broadcast %cst_1 : f32 to vector<16x128xf32>
    %4 = arith.maximumf %2, %3 : vector<16x128xf32>
    %5 = math.absf %2 : vector<16x128xf32>
    %cst_2 = arith.constant 0.000000e+00 : f32
    %6 = vector.broadcast %cst_2 : f32 to vector<16x128xf32>
    %7 = arith.subf %6, %5 : vector<16x128xf32>
    %8 = math.exp %7 : vector<16x128xf32>
    %9 = math.log1p %8 : vector<16x128xf32>
    %10 = arith.addf %4, %9 : vector<16x128xf32>
    %11 = vector.shape_cast %10 : vector<16x128xf32> to vector<2x8x128xf32>
    %cst_3 = arith.constant dense<0.000000e+00> : vector<8x128xf32>
    %12 = vector.multi_reduction <add>, %11, %cst_3 [0] : vector<2x8x128xf32> to vector<8x128xf32>
    %c0_4 = arith.constant 0 : index
    %c0_5 = arith.constant 0 : index
    %13 = vector.load %arg2[%c0_4, %c0_5] : memref<8x128xf32, #tpu.memory_space<vmem>>, vector<8x128xf32>
    tpu.vector_store %arg2[%c0_4, %c0_5], %12 {strides = array<i32>} : memref<8x128xf32, #tpu.memory_space<vmem>>, vector<8x128xf32>,
    return
  }
  func.func @transform_0(%arg0: i32) -> (i32, i32) {
    %c0_i32 = arith.constant 0 : i32
    %c0_i32_0 = arith.constant 0 : i32
    return %arg0, %c0_i32 : i32, i32
  }
  func.func @transform_1(%arg0: i32) -> (i32, i32) {
    %c0_i32 = arith.constant 0 : i32
    %c0_i32_0 = arith.constant 0 : i32
    return %arg0, %c0_i32 : i32, i32
  }
}

</mosaic_0001>

<llo_original>
// kernel: tpu_custom_call.1
$region0: #{tpu_custom_call.1}
  #allocation0 [shape = 'u32[]', space=smem, size = 0x4, offset = 0x4, fixed_abs, tag = 'smem constant byte address 0x4 - core index']
  #allocation1 [shape = 'u32[144,128]{1,0:T(1,128)}', space=vmem, size = 0x12000, scoped, tag = 'internal scratch']
  %s0 = inlined_call_operand.hbm [shape: f32[16,128], index: 0, kind: input, shape index: {}]
  %s1 = inlined_call_operand.hbm [shape: f32[8,128], index: 1, kind: output, shape index: {}]
  %s2 = sld [smem:[#allocation0]]
  $region18: #{tpu_custom_call.1} parent=0
    _
  %s4 = ssub.s32 1, %s2
  %s5 = scalar_select 0, %s4, %s2
  $region1: #{tpu_custom_call.1} parent=0
    #allocation2 [shape = 'u8[8192]{0}', space=vmem, size = 0x2000, scoped, tag = 'input window, operand 0, single buffered']
    #allocation3 [shape = 's32[1]{0}', space=sflag, size = 0x4, scoped, tag = 'scoped memory for tpu_custom_call.1']
    #allocation4 [shape = 's32[1]{0}', space=sflag, size = 0x4, scoped, tag = 'scoped memory for tpu_custom_call.1']
    #allocation5 [shape = 'u8[4096]{0}', space=vmem, size = 0x1000, scoped, tag = 'output window, operand 0, single buffered']
    %6 = vsyncpa [#allocation3], 0
    %7 = vsyncpa [#allocation4], 0
    // Predicated region
    $region2: #{tpu_custom_call.1} parent=1 // pred_check
      _
    $region3: #{tpu_custom_call.1} parent=1 // pred_check_branch
      %9 = sbr.rel (0) target = $region5
    $region4: #{tpu_custom_call.1} parent=1 // pred_region
      %s11 = ssub.s32 256, 256
      %12 = vsyncadd [#allocation3], %s11
      %s13 = sshll.u32 [#allocation2], 4
      %s14 = int_to_ptr.vmem [resolvable:$true] %s13
      %19 = dma.hbm_to_vmem [thread:$0]  %s0, 256, %s14, [#allocation3], 128, 128, 8
    $region5: #{tpu_custom_call.1} parent=1 // pred_fallthru
      _
    // Predicated region
    $region6: #{tpu_custom_call.1} parent=1 // pred_check
      _
    $region7: #{tpu_custom_call.1} parent=1 // pred_check_branch
      %21 = sbr.rel (0) target = $region9
    $region8: #{tpu_custom_call.1} parent=1 // pred_region
      %22 = dma.done [#allocation3], 256
    $region9: #{tpu_custom_call.1} parent=1 // pred_fallthru
      _
    %v23 = vld [vmem:[#allocation2] sm:$0xff]
    %v24 = vld [vmem:[#allocation2 + $0x8] sm:$0xff]
    %v25 = vsub.f32 0.0, %v23
    %v26 = vsub.f32 0.0, %v24
    %v27 = vmax.f32 %v25, 0.0
    %v28 = vmax.f32 %v26, 0.0
    %v29 = vand.u32 2147483647, %v25
    %v30 = vand.u32 2147483647, %v26
    %v31 = vsub.f32 0.0, %v29
    %v32 = vsub.f32 0.0, %v30
    %v33 = vmul.f32 %v31, 1.442695
    %v34 = vpow.pop %v33
    %v35 = vmul.f32 %v32, 1.442695
    %v36 = vpow.pop %v35
    %v37 = vadd.f32 %v34, 1.0
    %v38 = vlog2.pop %v37
    %v39 = vmul.f32 %v38, 0.6931472
    %v40 = vmul.f32 -0.5, %v34
    %v41 = vadd.f32 %v40, 1.0
    %v42 = vmul.f32 %v41, %v34
    %v43 = vand.u32 2147483647, %v34
    %vm44 = vcmp.lt.f32.partialorder %v43, 0.0004427343
    %v45 = vsel %vm44, %v42, %v39
    %v46 = vadd.f32 %v36, 1.0
    %v47 = vlog2.pop %v46
    %v48 = vmul.f32 %v47, 0.6931472
    %v49 = vmul.f32 -0.5, %v36
    %v50 = vadd.f32 %v49, 1.0
    %v51 = vmul.f32 %v50, %v36
    %v52 = vand.u32 2147483647, %v36
    %vm53 = vcmp.lt.f32.partialorder %v52, 0.0004427343
    %v54 = vsel %vm53, %v51, %v48
    %v55 = vadd.f32 %v27, %v45
    %v56 = vadd.f32 %v28, %v54
    %v57 = vadd.f32 %v55, %v56
    %58 = vst [vmem:[#allocation5] sm:$0xff] %v57
    // Predicated region
    $region10: #{tpu_custom_call.1} parent=1 // pred_check
      _
    $region11: #{tpu_custom_call.1} parent=1 // pred_check_branch
      %60 = sbr.rel (0) target = $region13
    $region12: #{tpu_custom_call.1} parent=1 // pred_region
      %s62 = ssub.s32 128, 128
      %63 = vsyncadd [#allocation4], %s62
      %s65 = sshll.u32 [#allocation5], 4
      %s66 = int_to_ptr.vmem [resolvable:$true] %s65
      %68 = dma.vmem_to_hbm [thread:$0]  %s66, 128, %s1, [#allocation4]
    $region13: #{tpu_custom_call.1} parent=1 // pred_fallthru
      _
    // Predicated region
    $region14: #{tpu_custom_call.1} parent=1 // pred_check
      _
    $region15: #{tpu_custom_call.1} parent=1 // pred_check_branch
      %70 = sbr.rel (0) target = $region17
    $region16: #{tpu_custom_call.1} parent=1 // pred_region
      %71 = dma.done [#allocation4], 128
    $region17: #{tpu_custom_call.1} parent=1 // pred_fallthru
      _
    %72 = vsyncpa [#allocation3], 1
    %73 = vsyncpa [#allocation4], 1

</llo_original>
